<compile_context>
chip_gen: v6e
topology: v6e:2x2x1
jax: 0.10.0
libtpu: 0.0.40
codegen_flags: <defaults>
</compile_context>

<pallas_src>
import functools

import jax
import jax.numpy as jnp
from jax.experimental import pallas as pl
from jax.experimental.pallas import tpu as pltpu

LANE = 128
SUBLANE = 8


def _round_up(x, m):
    return (x + m - 1) // m * m


def _default_batch_tile():
    # TM=256 on v6e/v7x, 128 on v5e (smaller MXU / HBM BW).
    try:
        kind = jax.devices()[0].device_kind.lower()
    except Exception:
        return 256
    if "v5 lite" in kind or "v5e" in kind:
        return 128
    return 256


def ppo_policy_kernel(x_ref, enc_w_ref, enc_b_ref, head_w_ref, head_b_ref,
                      out_ref, *, num_actions):
    # Encoder: h = relu(x @ W_enc + b_enc)   (bf16 operands, f32 accumulation)
    h = jnp.dot(x_ref[...], enc_w_ref[...], preferred_element_type=jnp.float32)
    h = jnp.maximum(h + enc_b_ref[...], 0.0)                      # [TM, F_pad]

    # Fused policy+value head: lanes 0:A = logits, lane A = value, rest = pad.
    head = jnp.dot(h, head_w_ref[...], preferred_element_type=jnp.float32)
    head = head + head_b_ref[...]                                 # [TM, P]

    # Categorical(logits): masked log-softmax over the real action lanes only.
    lane = jax.lax.broadcasted_iota(jnp.int32, head.shape, dimension=1)
    valid = lane < num_actions
    masked = jnp.where(valid, head, jnp.float32(-1e30))
    m = jnp.max(masked, axis=-1, keepdims=True)
    ex = jnp.where(valid, jnp.exp(masked - m), 0.0)
    lse = m + jnp.log(jnp.sum(ex, axis=-1, keepdims=True))
    logp = head - lse                                             # valid in 0:A

    # Lane-dense output slab: [head (P lanes) | log_probs (P lanes)].
    p = head.shape[-1]
    out_ref[:, 0:p] = head
    out_ref[:, p:2 * p] = logp


def ppo_policy_forward(x_nchw, params, *, tm=None):
    """x_nchw: [B, C, H, W] float32. Returns (logits, log_probs, value)."""
    B = x_nchw.shape[0]
    D = 1
    for s in x_nchw.shape[1:]:
        D *= s
    x_flat = x_nchw.reshape(B, D)

    enc_w, enc_b = params["enc_w"], params["enc_b"]
    pol_w, pol_b = params["pol_w"], params["pol_b"]
    val_w, val_b = params["val_w"], params["val_b"]
    F = enc_w.shape[1]
    A = pol_w.shape[1]

    # Lane-align everything (zero padding is correctness-neutral here).
    D_pad = _round_up(D, LANE)
    F_pad = _round_up(F, LANE)
    P = _round_up(A + 1, LANE)          # logits + value + pad in one head

    if tm is None:
        tm = _default_batch_tile()
    B_pad = _round_up(B, SUBLANE)
    tm = min(tm, B_pad)
    B_pad = _round_up(B_pad, tm)

    # bf16 streaming for the big encoder matmul operands (f32 accumulate).
    x_p = jnp.zeros((B_pad, D_pad), jnp.bfloat16).at[:B, :D].set(
        x_flat.astype(jnp.bfloat16))
    enc_w_p = jnp.zeros((D_pad, F_pad), jnp.bfloat16).at[:D, :F].set(
        enc_w.astype(jnp.bfloat16))
    enc_b_p = jnp.zeros((1, F_pad), jnp.float32).at[:, :F].set(enc_b)

    # Fuse policy + value heads into a single [F_pad, P] weight / [1, P] bias.
    head_w = jnp.concatenate([pol_w, val_w], axis=1)              # [F, A+1]
    head_b = jnp.concatenate([pol_b, val_b], axis=1)              # [1, A+1]
    head_w_p = jnp.zeros((F_pad, P), jnp.float32).at[:F, :A + 1].set(head_w)
    head_b_p = jnp.zeros((1, P), jnp.float32).at[:, :A + 1].set(head_b)

    grid = (B_pad // tm,)
    kernel = functools.partial(ppo_policy_kernel, num_actions=A)

    out = pl.pallas_call(
        kernel,
        grid=grid,
        in_specs=[
            pl.BlockSpec((tm, D_pad), lambda i: (i, 0)),      # x: batch-tiled
            pl.BlockSpec((D_pad, F_pad), lambda i: (0, 0)),   # enc_w resident
            pl.BlockSpec((1, F_pad), lambda i: (0, 0)),       # enc_b resident
            pl.BlockSpec((F_pad, P), lambda i: (0, 0)),       # fused head_w
            pl.BlockSpec((1, P), lambda i: (0, 0)),           # fused head_b
        ],
        out_specs=pl.BlockSpec((tm, 2 * P), lambda i: (i, 0)),
        out_shape=jax.ShapeDtypeStruct((B_pad, 2 * P), jnp.float32),
        compiler_params=pltpu.CompilerParams(
            dimension_semantics=("parallel",)),
    )(x_p, enc_w_p, enc_b_p, head_w_p, head_b_p)

    # Un-pad / un-fuse in the wrapper (pure slicing, no compute).
    logits = out[:B, 0:A]
    log_probs = out[:B, P:P + A]
    value = out[:B, A]                  # torch: self.value(x).squeeze(1)
    return logits, log_probs, value


def _orthogonal(key, shape, gain):
    # Matches torch.nn.init.orthogonal_ semantics up to a sign convention.
    init = jax.nn.initializers.orthogonal(scale=gain)
    return init(key, shape, jnp.float32)


def make_params(key, in_dim, feature_dim, num_actions):
    k_enc, k_pol, k_val = jax.random.split(key, 3)
    # Encoder Linear(D, feature_dim): deterministic synthetic init.
    # TODO(synk): PyTorch nn.Linear default is kaiming_uniform; exact parity
    # of the injected encoder's init is not specified by the module.
    enc_w = (jax.random.normal(k_enc, (in_dim, feature_dim), jnp.float32)
             / jnp.sqrt(jnp.float32(in_dim)))
    enc_b = jnp.zeros((1, feature_dim), jnp.float32)
    # policy = orthogonal_init(Linear(feature_dim, num_actions), gain=0.01)
    pol_w = _orthogonal(k_pol, (feature_dim, num_actions), gain=0.01)
    pol_b = jnp.zeros((1, num_actions), jnp.float32)
    # value = orthogonal_init(Linear(feature_dim, 1), gain=1.0)
    val_w = _orthogonal(k_val, (feature_dim, 1), gain=1.0)
    val_b = jnp.zeros((1, 1), jnp.float32)
    return dict(enc_w=enc_w, enc_b=enc_b, pol_w=pol_w, pol_b=pol_b,
                val_w=val_w, val_b=val_b)


if __name__ == "__main__":
    key = jax.random.PRNGKey(0)
    k_x, k_p = jax.random.split(key)

    B, C, H, W = 8, 4, 16, 16
    feature_dim = 32
    num_actions = 16
    D = C * H * W

    x = jax.random.normal(k_x, (B, C, H, W), jnp.float32)
    params = make_params(k_p, D, feature_dim, num_actions)

    fwd = jax.jit(functools.partial(ppo_policy_forward, params=params))
    logits, log_probs, value = fwd(x)
    jax.block_until_ready((logits, log_probs, value))

    # Pure-JAX reference using the same bf16-operand / f32-accumulate encoder.
    xb = x.reshape(B, D).astype(jnp.bfloat16)
    wb = params["enc_w"].astype(jnp.bfloat16)
    h_ref = jnp.maximum(
        jnp.dot(xb, wb, preferred_element_type=jnp.float32) + params["enc_b"],
        0.0)
    logits_ref = h_ref @ params["pol_w"] + params["pol_b"]
    value_ref = (h_ref @ params["val_w"] + params["val_b"])[:, 0]
    logp_ref = jax.nn.log_softmax(logits_ref, axis=-1)

    assert logits.shape == (B, num_actions) and value.shape == (B,)
    assert jnp.allclose(logits, logits_ref, atol=1e-2, rtol=1e-2)
    assert jnp.allclose(log_probs, logp_ref, atol=1e-2, rtol=1e-2)
    assert jnp.allclose(value, value_ref, atol=1e-2, rtol=1e-2)
    # Padded-lane masking sanity: probabilities sum to 1 over real actions.
    assert jnp.allclose(jnp.sum(jnp.exp(log_probs), axis=-1), 1.0, atol=1e-3)

    # TODO(synk): dist.sample()/log_prob(action) from .act() need stateful RNG
    # sampling; forward() only requires the distribution (logits/log-probs).
    print("KERNEL_OK")
</pallas_src>

<mosaic_0001>
module attributes {stable_mosaic.version = 11 : i64} {
  func.func @ppo_policy_kernel(%arg0: i32, %arg1: memref<8x1024xbf16, #tpu.memory_space<vmem>>, %arg2: memref<1024x128xbf16, #tpu.memory_space<vmem>>, %arg3: memref<1x128xf32, #tpu.memory_space<vmem>>, %arg4: memref<128x128xf32, #tpu.memory_space<vmem>>, %arg5: memref<1x128xf32, #tpu.memory_space<vmem>>, %arg6: memref<8x256xf32, #tpu.memory_space<vmem>>) attributes {dimension_semantics = [#tpu.dimension_semantics<parallel>], iteration_bounds = array<i64: 1>, scalar_prefetch = 0 : i64, scratch_operands = 0 : i64, tpu.core_type = #tpu.core_type<tc>, window_params = [{transform_indices = @transform_0, window_bounds = array<i64: 8, 1024>}, {pipeline_mode = #tpu.pipeline_mode<synchronous>, transform_indices = @transform_1, window_bounds = array<i64: 1024, 128>}, {pipeline_mode = #tpu.pipeline_mode<synchronous>, transform_indices = @transform_2, window_bounds = array<i64: 1, 128>}, {pipeline_mode = #tpu.pipeline_mode<synchronous>, transform_indices = @transform_3, window_bounds = array<i64: 128, 128>}, {pipeline_mode = #tpu.pipeline_mode<synchronous>, transform_indices = @transform_4, window_bounds = array<i64: 1, 128>}, {transform_indices = @transform_5, window_bounds = array<i64: 8, 256>}]} {
    %c0 = arith.constant 0 : index
    %c0_0 = arith.constant 0 : index
    %0 = vector.load %arg1[%c0, %c0_0] : memref<8x1024xbf16, #tpu.memory_space<vmem>>, vector<8x1024xbf16>
    %c0_1 = arith.constant 0 : index
    %c0_2 = arith.constant 0 : index
    %1 = vector.load %arg2[%c0_1, %c0_2] : memref<1024x128xbf16, #tpu.memory_space<vmem>>, vector<1024x128xbf16>
    %cst = arith.constant dense<0.000000e+00> : vector<8x128xf32>
    %2 = tpu.matmul %0, %1, %cst {dimension_numbers = #tpu.dot_dimension_numbers<[1], [0], [0], [1], [0, 0, 1, 1], [], []>} : vector<8x1024xbf16>, vector<1024x128xbf16>, vector<8x128xf32> -> vector<8x128xf32>
    %c0_3 = arith.constant 0 : index
    %c0_4 = arith.constant 0 : index
    %3 = vector.load %arg3[%c0_3, %c0_4] : memref<1x128xf32, #tpu.memory_space<vmem>>, vector<1x128xf32>
    %4 = vector.broadcast %3 : vector<1x128xf32> to vector<8x128xf32>
    %5 = arith.addf %2, %4 : vector<8x128xf32>
    %cst_5 = arith.constant 0.000000e+00 : f32
    %6 = vector.broadcast %cst_5 : f32 to vector<8x128xf32>
    %7 = arith.maximumf %5, %6 : vector<8x128xf32>
    %c0_6 = arith.constant 0 : index
    %c0_7 = arith.constant 0 : index
    %8 = vector.load %arg4[%c0_6, %c0_7] : memref<128x128xf32, #tpu.memory_space<vmem>>, vector<128x128xf32>
    %cst_8 = arith.constant dense<0.000000e+00> : vector<8x128xf32>
    %9 = tpu.matmul %7, %8, %cst_8 {dimension_numbers = #tpu.dot_dimension_numbers<[1], [0], [0], [1], [0, 0, 1, 1], [], []>} : vector<8x128xf32>, vector<128x128xf32>, vector<8x128xf32> -> vector<8x128xf32>
    %c0_9 = arith.constant 0 : index
    %c0_10 = arith.constant 0 : index
    %10 = vector.load %arg5[%c0_9, %c0_10] : memref<1x128xf32, #tpu.memory_space<vmem>>, vector<1x128xf32>
    %11 = vector.broadcast %10 : vector<1x128xf32> to vector<8x128xf32>
    %12 = arith.addf %9, %11 : vector<8x128xf32>
    %13 = tpu.iota {dimensions = array<i32: 1>} : vector<8x128xi32>
    %c16_i32 = arith.constant 16 : i32
    %14 = vector.broadcast %c16_i32 : i32 to vector<8x128xi32>
    %15 = arith.cmpi slt, %13, %14 : vector<8x128xi32>
    %cst_11 = arith.constant -1.000000e+30 : f32
    %16 = vector.broadcast %cst_11 : f32 to vector<8x128xf32>
    %17 = arith.select %15, %12, %16 : vector<8x128xi1>, vector<8x128xf32>
    %cst_12 = arith.constant dense<0xFF800000> : vector<8xf32>
    %18 = vector.multi_reduction <maximumf>, %17, %cst_12 [1] : vector<8x128xf32> to vector<8xf32>
    %19 = vector.shape_cast %18 : vector<8xf32> to vector<8x1xf32>
    %20 = vector.broadcast %19 : vector<8x1xf32> to vector<8x128xf32>
    %21 = arith.subf %17, %20 : vector<8x128xf32>
    %22 = math.exp %21 : vector<8x128xf32>
    %cst_13 = arith.constant 0.000000e+00 : f32
    %23 = vector.broadcast %cst_13 : f32 to vector<8x128xf32>
    %24 = arith.select %15, %22, %23 : vector<8x128xi1>, vector<8x128xf32>
    %cst_14 = arith.constant dense<0.000000e+00> : vector<8xf32>
    %25 = vector.multi_reduction <add>, %24, %cst_14 [1] : vector<8x128xf32> to vector<8xf32>
    %26 = vector.shape_cast %25 : vector<8xf32> to vector<8x1xf32>
    %27 = math.log %26 : vector<8x1xf32>
    %28 = arith.addf %19, %27 : vector<8x1xf32>
    %29 = vector.broadcast %28 : vector<8x1xf32> to vector<8x128xf32>
    %30 = arith.subf %12, %29 : vector<8x128xf32>
    %c0_15 = arith.constant 0 : index
    %c0_16 = arith.constant 0 : index
    %31 = vector.load %arg6[%c0_15, %c0_16] : memref<8x256xf32, #tpu.memory_space<vmem>>, vector<8x128xf32>
    tpu.vector_store %arg6[%c0_15, %c0_16], %12 {strides = array<i32>} : memref<8x256xf32, #tpu.memory_space<vmem>>, vector<8x128xf32>,
    %c0_17 = arith.constant 0 : index
    %c128 = arith.constant 128 : index
    %32 = vector.load %arg6[%c0_17, %c128] : memref<8x256xf32, #tpu.memory_space<vmem>>, vector<8x128xf32>
    tpu.vector_store %arg6[%c0_17, %c128], %30 {strides = array<i32>} : memref<8x256xf32, #tpu.memory_space<vmem>>, vector<8x128xf32>,
    return
  }
  func.func @transform_0(%arg0: i32) -> (i32, i32) {
    %c0_i32 = arith.constant 0 : i32
    %c0_i32_0 = arith.constant 0 : i32
    return %arg0, %c0_i32 : i32, i32
  }
  func.func @transform_1(%arg0: i32) -> (i32, i32) {
    %c0_i32 = arith.constant 0 : i32
    %c0_i32_0 = arith.constant 0 : i32
    %c0_i32_1 = arith.constant 0 : i32
    return %c0_i32, %c0_i32_0 : i32, i32
  }
  func.func @transform_2(%arg0: i32) -> (i32, i32) {
    %c0_i32 = arith.constant 0 : i32
    %c0_i32_0 = arith.constant 0 : i32
    %c0_i32_1 = arith.constant 0 : i32
    return %c0_i32, %c0_i32_0 : i32, i32
  }
  func.func @transform_3(%arg0: i32) -> (i32, i32) {
    %c0_i32 = arith.constant 0 : i32
    %c0_i32_0 = arith.constant 0 : i32
    %c0_i32_1 = arith.constant 0 : i32
    return %c0_i32, %c0_i32_0 : i32, i32
  }
  func.func @transform_4(%arg0: i32) -> (i32, i32) {
    %c0_i32 = arith.constant 0 : i32
    %c0_i32_0 = arith.constant 0 : i32
    %c0_i32_1 = arith.constant 0 : i32
    return %c0_i32, %c0_i32_0 : i32, i32
  }
  func.func @transform_5(%arg0: i32) -> (i32, i32) {
    %c0_i32 = arith.constant 0 : i32
    %c0_i32_0 = arith.constant 0 : i32
    return %arg0, %c0_i32 : i32, i32
  }
}

</mosaic_0001>

<llo_original>
// kernel: ppo_policy_forward.1
$region0: #{ppo_policy_forward.1}
  #allocation0 [shape = 'u32[]', space=smem, size = 0x4, offset = 0x4, fixed_abs, tag = 'smem constant byte address 0x4 - core index']
  #allocation1 [shape = 'u32[144,128]{1,0:T(1,128)}', space=vmem, size = 0x12000, scoped, tag = 'internal scratch']
  %s0 = inlined_call_operand.vmem [shape: bf16[8,1024], index: 0, kind: input, shape index: {}]
  %s1 = inlined_call_operand.vmem [shape: bf16[1024,128], index: 1, kind: input, shape index: {}]
  %s2 = inlined_call_operand.vmem [shape: f32[1,128], index: 2, kind: input, shape index: {}, may-alias: {2,4}]
  %s3 = inlined_call_operand.vmem [shape: f32[128,128], index: 3, kind: input, shape index: {}]
  %s4 = inlined_call_operand.vmem [shape: f32[1,128], index: 4, kind: input, shape index: {}, may-alias: {2,4}]
  %s5 = inlined_call_operand.vmem [shape: f32[8,256], index: 5, kind: output, shape index: {}]
  %s6 = sld [smem:[#allocation0]]
  $region30: #{ppo_policy_forward.1} parent=0
    _
  %s8 = ssub.s32 1, %s6
  %s9 = scalar_select 0, %s8, %s6
  // Predicated region
  $region2: #{ppo_policy_forward.1} parent=0 // pred_check
    _
  $region3: #{ppo_policy_forward.1} parent=0 // pred_check_branch
    %11 = sbr.rel (0) target = $region5
  $region4: #{ppo_policy_forward.1} parent=0 // pred_region
    _
  $region5: #{ppo_policy_forward.1} parent=0 // pred_fallthru
    _
  // Predicated region
  $region6: #{ppo_policy_forward.1} parent=0 // pred_check
    _
  $region7: #{ppo_policy_forward.1} parent=0 // pred_check_branch
    %13 = sbr.rel (0) target = $region9
  $region8: #{ppo_policy_forward.1} parent=0 // pred_region
    _
  $region9: #{ppo_policy_forward.1} parent=0 // pred_fallthru
    _
  // Predicated region
  $region10: #{ppo_policy_forward.1} parent=0 // pred_check
    _
  $region11: #{ppo_policy_forward.1} parent=0 // pred_check_branch
    %15 = sbr.rel (0) target = $region13
  $region12: #{ppo_policy_forward.1} parent=0 // pred_region
    _
  $region13: #{ppo_policy_forward.1} parent=0 // pred_fallthru
    _
  // Predicated region
  $region14: #{ppo_policy_forward.1} parent=0 // pred_check
    _
  $region15: #{ppo_policy_forward.1} parent=0 // pred_check_branch
    %17 = sbr.rel (0) target = $region17
  $region16: #{ppo_policy_forward.1} parent=0 // pred_region
    _
  $region17: #{ppo_policy_forward.1} parent=0 // pred_fallthru
    _
  // Predicated region
  $region18: #{ppo_policy_forward.1} parent=0 // pred_check
    _
  $region19: #{ppo_policy_forward.1} parent=0 // pred_check_branch
    %19 = sbr.rel (0) target = $region21
  $region20: #{ppo_policy_forward.1} parent=0 // pred_region
    _
  $region21: #{ppo_policy_forward.1} parent=0 // pred_fallthru
    _
  %v21 = vld [vmem:[%s0] sm:$0xff]
  %v22 = vld [vmem:[%s0 + $0x8] sm:$0xff]
  %v23 = vld [vmem:[%s0 + $0x10] sm:$0xff]
  %v24 = vld [vmem:[%s0 + $0x18] sm:$0xff]
  %v25 = vld [vmem:[%s1] sm:$0xf]
  %v26 = vld [vmem:[%s1 + $0x4] sm:$0xf]
  %v27 = vld [vmem:[%s1 + $0x8] sm:$0xf]
  %v28 = vld [vmem:[%s1 + $0xc] sm:$0xf]
  %v29 = vld [vmem:[%s1 + $0x10] sm:$0xf]
  %v30 = vld [vmem:[%s1 + $0x14] sm:$0xf]
  %v31 = vld [vmem:[%s1 + $0x18] sm:$0xf]
  %v32 = vld [vmem:[%s1 + $0x1c] sm:$0xf]
  %v33 = vld [vmem:[%s1 + $0x20] sm:$0xf]
  %v34 = vld [vmem:[%s1 + $0x24] sm:$0xf]
  %v35 = vld [vmem:[%s1 + $0x28] sm:$0xf]
  %v36 = vld [vmem:[%s1 + $0x2c] sm:$0xf]
  %v37 = vld [vmem:[%s1 + $0x30] sm:$0xf]
  %v38 = vld [vmem:[%s1 + $0x34] sm:$0xf]
  %v39 = vld [vmem:[%s1 + $0x38] sm:$0xf]
  %v40 = vld [vmem:[%s1 + $0x3c] sm:$0xf]
  %v41 = vld [vmem:[%s1 + $0x40] sm:$0xf]
  %v42 = vld [vmem:[%s1 + $0x44] sm:$0xf]
  %v43 = vld [vmem:[%s1 + $0x48] sm:$0xf]
  %v44 = vld [vmem:[%s1 + $0x4c] sm:$0xf]
  %v45 = vld [vmem:[%s1 + $0x50] sm:$0xf]
  %v46 = vld [vmem:[%s1 + $0x54] sm:$0xf]
  %v47 = vld [vmem:[%s1 + $0x58] sm:$0xf]
  %v48 = vld [vmem:[%s1 + $0x5c] sm:$0xf]
  %v49 = vld [vmem:[%s1 + $0x60] sm:$0xf]
  %v50 = vld [vmem:[%s1 + $0x64] sm:$0xf]
  %v51 = vld [vmem:[%s1 + $0x68] sm:$0xf]
  %v52 = vld [vmem:[%s1 + $0x6c] sm:$0xf]
  %v53 = vld [vmem:[%s1 + $0x70] sm:$0xf]
  %v54 = vld [vmem:[%s1 + $0x74] sm:$0xf]
  %v55 = vld [vmem:[%s1 + $0x78] sm:$0xf]
  %v56 = vld [vmem:[%s1 + $0x7c] sm:$0xf]
  %v57 = vld [vmem:[%s1 + $0x80] sm:$0xf]
  %v58 = vld [vmem:[%s1 + $0x84] sm:$0xf]
  %v59 = vld [vmem:[%s1 + $0x88] sm:$0xf]
  %v60 = vld [vmem:[%s1 + $0x8c] sm:$0xf]
  %v61 = vld [vmem:[%s1 + $0x90] sm:$0xf]
  %v62 = vld [vmem:[%s1 + $0x94] sm:$0xf]
  %v63 = vld [vmem:[%s1 + $0x98] sm:$0xf]
  %v64 = vld [vmem:[%s1 + $0x9c] sm:$0xf]
  %v65 = vld [vmem:[%s1 + $0xa0] sm:$0xf]
  %v66 = vld [vmem:[%s1 + $0xa4] sm:$0xf]
  %v67 = vld [vmem:[%s1 + $0xa8] sm:$0xf]
  %v68 = vld [vmem:[%s1 + $0xac] sm:$0xf]
  %v69 = vld [vmem:[%s1 + $0xb0] sm:$0xf]
  %v70 = vld [vmem:[%s1 + $0xb4] sm:$0xf]
  %v71 = vld [vmem:[%s1 + $0xb8] sm:$0xf]
  %v72 = vld [vmem:[%s1 + $0xbc] sm:$0xf]
  %v73 = vld [vmem:[%s1 + $0xc0] sm:$0xf]
  %v74 = vld [vmem:[%s1 + $0xc4] sm:$0xf]
  %v75 = vld [vmem:[%s1 + $0xc8] sm:$0xf]
  %v76 = vld [vmem:[%s1 + $0xcc] sm:$0xf]
  %v77 = vld [vmem:[%s1 + $0xd0] sm:$0xf]
  %v78 = vld [vmem:[%s1 + $0xd4] sm:$0xf]
  %v79 = vld [vmem:[%s1 + $0xd8] sm:$0xf]
  %v80 = vld [vmem:[%s1 + $0xdc] sm:$0xf]
  %v81 = vld [vmem:[%s1 + $0xe0] sm:$0xf]
  %v82 = vld [vmem:[%s1 + $0xe4] sm:$0xf]
  %v83 = vld [vmem:[%s1 + $0xe8] sm:$0xf]
  %v84 = vld [vmem:[%s1 + $0xec] sm:$0xf]
  %v85 = vld [vmem:[%s1 + $0xf0] sm:$0xf]
  %v86 = vld [vmem:[%s1 + $0xf4] sm:$0xf]
  %v87 = vld [vmem:[%s1 + $0xf8] sm:$0xf]
  %v88 = vld [vmem:[%s1 + $0xfc] sm:$0xf]
  %v89 = vld [vmem:[%s1 + $0x100] sm:$0xf]
  %v90 = vld [vmem:[%s1 + $0x104] sm:$0xf]
  %v91 = vld [vmem:[%s1 + $0x108] sm:$0xf]
  %v92 = vld [vmem:[%s1 + $0x10c] sm:$0xf]
  %v93 = vld [vmem:[%s1 + $0x110] sm:$0xf]
  %v94 = vld [vmem:[%s1 + $0x114] sm:$0xf]
  %v95 = vld [vmem:[%s1 + $0x118] sm:$0xf]
  %v96 = vld [vmem:[%s1 + $0x11c] sm:$0xf]
  %v97 = vld [vmem:[%s1 + $0x120] sm:$0xf]
  %v98 = vld [vmem:[%s1 + $0x124] sm:$0xf]
  %v99 = vld [vmem:[%s1 + $0x128] sm:$0xf]
  %v100 = vld [vmem:[%s1 + $0x12c] sm:$0xf]
  %v101 = vld [vmem:[%s1 + $0x130] sm:$0xf]
  %v102 = vld [vmem:[%s1 + $0x134] sm:$0xf]
  %v103 = vld [vmem:[%s1 + $0x138] sm:$0xf]
  %v104 = vld [vmem:[%s1 + $0x13c] sm:$0xf]
  %v105 = vld [vmem:[%s1 + $0x140] sm:$0xf]
  %v106 = vld [vmem:[%s1 + $0x144] sm:$0xf]
  %v107 = vld [vmem:[%s1 + $0x148] sm:$0xf]
  %v108 = vld [vmem:[%s1 + $0x14c] sm:$0xf]
  %v109 = vld [vmem:[%s1 + $0x150] sm:$0xf]
  %v110 = vld [vmem:[%s1 + $0x154] sm:$0xf]
  %v111 = vld [vmem:[%s1 + $0x158] sm:$0xf]
  %v112 = vld [vmem:[%s1 + $0x15c] sm:$0xf]
  %v113 = vld [vmem:[%s1 + $0x160] sm:$0xf]
  %v114 = vld [vmem:[%s1 + $0x164] sm:$0xf]
  %v115 = vld [vmem:[%s1 + $0x168] sm:$0xf]
  %v116 = vld [vmem:[%s1 + $0x16c] sm:$0xf]
  %v117 = vld [vmem:[%s1 + $0x170] sm:$0xf]
  %v118 = vld [vmem:[%s1 + $0x174] sm:$0xf]
  %v119 = vld [vmem:[%s1 + $0x178] sm:$0xf]
  %v120 = vld [vmem:[%s1 + $0x17c] sm:$0xf]
  %v121 = vld [vmem:[%s1 + $0x180] sm:$0xf]
  %v122 = vld [vmem:[%s1 + $0x184] sm:$0xf]
  %v123 = vld [vmem:[%s1 + $0x188] sm:$0xf]
  %v124 = vld [vmem:[%s1 + $0x18c] sm:$0xf]
  %v125 = vld [vmem:[%s1 + $0x190] sm:$0xf]
  %v126 = vld [vmem:[%s1 + $0x194] sm:$0xf]
  %v127 = vld [vmem:[%s1 + $0x198] sm:$0xf]
  %v128 = vld [vmem:[%s1 + $0x19c] sm:$0xf]
  %v129 = vld [vmem:[%s1 + $0x1a0] sm:$0xf]
  %v130 = vld [vmem:[%s1 + $0x1a4] sm:$0xf]
  %v131 = vld [vmem:[%s1 + $0x1a8] sm:$0xf]
  %v132 = vld [vmem:[%s1 + $0x1ac] sm:$0xf]
  %v133 = vld [vmem:[%s1 + $0x1b0] sm:$0xf]
  %v134 = vld [vmem:[%s1 + $0x1b4] sm:$0xf]
  %v135 = vld [vmem:[%s1 + $0x1b8] sm:$0xf]
  %v136 = vld [vmem:[%s1 + $0x1bc] sm:$0xf]
  %v137 = vld [vmem:[%s1 + $0x1c0] sm:$0xf]
  %v138 = vld [vmem:[%s1 + $0x1c4] sm:$0xf]
  %v139 = vld [vmem:[%s1 + $0x1c8] sm:$0xf]
  %v140 = vld [vmem:[%s1 + $0x1cc] sm:$0xf]
  %v141 = vld [vmem:[%s1 + $0x1d0] sm:$0xf]
  %v142 = vld [vmem:[%s1 + $0x1d4] sm:$0xf]
  %v143 = vld [vmem:[%s1 + $0x1d8] sm:$0xf]
  %v144 = vld [vmem:[%s1 + $0x1dc] sm:$0xf]
  %v145 = vld [vmem:[%s1 + $0x1e0] sm:$0xf]
  %v146 = vld [vmem:[%s1 + $0x1e4] sm:$0xf]
  %v147 = vld [vmem:[%s1 + $0x1e8] sm:$0xf]
  %v148 = vld [vmem:[%s1 + $0x1ec] sm:$0xf]
  %v149 = vld [vmem:[%s1 + $0x1f0] sm:$0xf]
  %v150 = vld [vmem:[%s1 + $0x1f4] sm:$0xf]
  %v151 = vld [vmem:[%s1 + $0x1f8] sm:$0xf]
  %v152 = vld [vmem:[%s1 + $0x1fc] sm:$0xf]
  %v153 = vld [vmem:[%s2] sm:$0x1]
  %v155 = vlaneseq
  %v156 = vshrl.u32 %v155, 7
  %v157 = vsub.s32 0, %v156
  %v158 = vrot.slane %v153, %v157
  %v164 = vunpack.c.l.b16 %v21
  %v165 = vunpack.c.h.b16 %v21
  %v166 = vunpack.c.l.b16 %v22
  %v167 = vunpack.c.h.b16 %v22
  %v168 = vunpack.c.l.b16 %v23
  %v169 = vunpack.c.h.b16 %v23
  %v170 = vunpack.c.l.b16 %v24
  %v171 = vunpack.c.h.b16 %v24
  %v172 = vpack.c.b16 %v164, %v164
  %v173 = vpack.c.b16 %v165, %v165
  %v174 = vpack.c.b16 %v166, %v166
  %v175 = vpack.c.b16 %v167, %v167
  %v176 = vpack.c.b16 %v168, %v168
  %v177 = vpack.c.b16 %v169, %v169
  %v178 = vpack.c.b16 %v170, %v170
  %v179 = vpack.c.b16 %v171, %v171
  %v316 = vunpack.c.l.b16 %v25
  %v317 = vunpack.c.l.b16 %v26
  %v318 = vunpack.c.l.b16 %v27
  %v319 = vunpack.c.l.b16 %v28
  %v320 = vunpack.c.l.b16 %v29
  %v321 = vunpack.c.l.b16 %v30
  %v322 = vunpack.c.l.b16 %v31
  %v323 = vunpack.c.l.b16 %v32
  %v324 = vunpack.c.l.b16 %v33
  %v325 = vunpack.c.l.b16 %v34
  %v326 = vunpack.c.l.b16 %v35
  %v327 = vunpack.c.l.b16 %v36
  %v328 = vunpack.c.l.b16 %v37
  %v329 = vunpack.c.l.b16 %v38
  %v330 = vunpack.c.l.b16 %v39
  %v331 = vunpack.c.l.b16 %v40
  %v332 = vunpack.c.l.b16 %v41
  %v333 = vunpack.c.l.b16 %v42
  %v334 = vunpack.c.l.b16 %v43
  %v335 = vunpack.c.l.b16 %v44
  %v336 = vunpack.c.l.b16 %v45
  %v337 = vunpack.c.l.b16 %v46
  %v338 = vunpack.c.l.b16 %v47
  %v339 = vunpack.c.l.b16 %v48
  %v340 = vunpack.c.l.b16 %v49
  %v341 = vunpack.c.l.b16 %v50
  %v342 = vunpack.c.l.b16 %v51
  %v343 = vunpack.c.l.b16 %v52
  %v344 = vunpack.c.l.b16 %v53
  %v345 = vunpack.c.l.b16 %v54
  %v346 = vunpack.c.l.b16 %v55
  %v347 = vunpack.c.l.b16 %v56
  %v348 = vunpack.c.l.b16 %v57
  %v349 = vunpack.c.l.b16 %v58
  %v350 = vunpack.c.l.b16 %v59
  %v351 = vunpack.c.l.b16 %v60
  %v352 = vunpack.c.l.b16 %v61
  %v353 = vunpack.c.l.b16 %v62
  %v354 = vunpack.c.l.b16 %v63
  %v355 = vunpack.c.l.b16 %v64
  %v356 = vunpack.c.l.b16 %v65
  %v357 = vunpack.c.l.b16 %v66
  %v358 = vunpack.c.l.b16 %v67
  %v359 = vunpack.c.l.b16 %v68
  %v360 = vunpack.c.l.b16 %v69
  %v361 = vunpack.c.l.b16 %v70
  %v362 = vunpack.c.l.b16 %v71
  %v363 = vunpack.c.l.b16 %v72
  %v364 = vunpack.c.l.b16 %v73
  %v365 = vunpack.c.l.b16 %v74
  %v366 = vunpack.c.l.b16 %v75
  %v367 = vunpack.c.l.b16 %v76
  %v368 = vunpack.c.l.b16 %v77
  %v369 = vunpack.c.l.b16 %v78
  %v370 = vunpack.c.l.b16 %v79
  %v371 = vunpack.c.l.b16 %v80
  %v372 = vunpack.c.l.b16 %v81
  %v373 = vunpack.c.l.b16 %v82
  %v374 = vunpack.c.l.b16 %v83
  %v375 = vunpack.c.l.b16 %v84
  %v376 = vunpack.c.l.b16 %v85
  %v377 = vunpack.c.l.b16 %v86
  %v378 = vunpack.c.l.b16 %v87
  %v379 = vunpack.c.l.b16 %v88
  %v380 = vunpack.c.l.b16 %v89
  %v381 = vunpack.c.l.b16 %v90
  %v382 = vunpack.c.l.b16 %v91
  %v383 = vunpack.c.l.b16 %v92
  %v384 = vunpack.c.l.b16 %v93
  %v385 = vunpack.c.l.b16 %v94
  %v386 = vunpack.c.l.b16 %v95
  %v387 = vunpack.c.l.b16 %v96
  %v388 = vunpack.c.l.b16 %v97
  %v389 = vunpack.c.l.b16 %v98
  %v390 = vunpack.c.l.b16 %v99
  %v391 = vunpack.c.l.b16 %v100
  %v392 = vunpack.c.l.b16 %v101
  %v393 = vunpack.c.l.b16 %v102
  %v394 = vunpack.c.l.b16 %v103
  %v395 = vunpack.c.l.b16 %v104
  %v396 = vunpack.c.l.b16 %v105
  %v397 = vunpack.c.l.b16 %v106
  %v398 = vunpack.c.l.b16 %v107
  %v399 = vunpack.c.l.b16 %v108
  %v400 = vunpack.c.l.b16 %v109
  %v401 = vunpack.c.l.b16 %v110
  %v402 = vunpack.c.l.b16 %v111
  %v403 = vunpack.c.l.b16 %v112
  %v404 = vunpack.c.l.b16 %v113
  %v405 = vunpack.c.l.b16 %v114
  %v406 = vunpack.c.l.b16 %v115
  %v407 = vunpack.c.l.b16 %v116
  %v408 = vunpack.c.l.b16 %v117
  %v409 = vunpack.c.l.b16 %v118
  %v410 = vunpack.c.l.b16 %v119
  %v411 = vunpack.c.l.b16 %v120
  %v412 = vunpack.c.l.b16 %v121
  %v413 = vunpack.c.l.b16 %v122
  %v414 = vunpack.c.l.b16 %v123
  %v415 = vunpack.c.l.b16 %v124
  %v416 = vunpack.c.l.b16 %v125
  %v417 = vunpack.c.l.b16 %v126
  %v418 = vunpack.c.l.b16 %v127
  %v419 = vunpack.c.l.b16 %v128
  %v420 = vunpack.c.l.b16 %v129
  %v421 = vunpack.c.l.b16 %v130
  %v422 = vunpack.c.l.b16 %v131
  %v423 = vunpack.c.l.b16 %v132
  %v424 = vunpack.c.l.b16 %v133
  %v425 = vunpack.c.l.b16 %v134
  %v426 = vunpack.c.l.b16 %v135
  %v427 = vunpack.c.l.b16 %v136
  %v428 = vunpack.c.l.b16 %v137
  %v429 = vunpack.c.l.b16 %v138
  %v430 = vunpack.c.l.b16 %v139
  %v431 = vunpack.c.l.b16 %v140
  %v432 = vunpack.c.l.b16 %v141
  %v433 = vunpack.c.l.b16 %v142
  %v434 = vunpack.c.l.b16 %v143
  %v435 = vunpack.c.l.b16 %v144
  %v436 = vunpack.c.l.b16 %v145
  %v437 = vunpack.c.l.b16 %v146
  %v438 = vunpack.c.l.b16 %v147
  %v439 = vunpack.c.l.b16 %v148
  %v440 = vunpack.c.l.b16 %v149
  %v441 = vunpack.c.l.b16 %v150
  %v442 = vunpack.c.l.b16 %v151
  %v443 = vunpack.c.l.b16 %v152
  %v444 = vpack.c.b16 %v317, %v316
  %v445 = vpack.c.b16 %v319, %v318
  %v446 = vpack.c.b16 %v321, %v320
  %v447 = vpack.c.b16 %v323, %v322
  %v448 = vpack.c.b16 %v325, %v324
  %v449 = vpack.c.b16 %v327, %v326
  %v450 = vpack.c.b16 %v329, %v328
  %v451 = vpack.c.b16 %v331, %v330
  %v452 = vpack.c.b16 %v333, %v332
  %v453 = vpack.c.b16 %v335, %v334
  %v454 = vpack.c.b16 %v337, %v336
  %v455 = vpack.c.b16 %v339, %v338
  %v456 = vpack.c.b16 %v341, %v340
  %v457 = vpack.c.b16 %v343, %v342
  %v458 = vpack.c.b16 %v345, %v344
  %v459 = vpack.c.b16 %v347, %v346
  %v460 = vpack.c.b16 %v349, %v348
  %v461 = vpack.c.b16 %v351, %v350
  %v462 = vpack.c.b16 %v353, %v352
  %v463 = vpack.c.b16 %v355, %v354
  %v464 = vpack.c.b16 %v357, %v356
  %v465 = vpack.c.b16 %v359, %v358
  %v466 = vpack.c.b16 %v361, %v360
  %v467 = vpack.c.b16 %v363, %v362
  %v468 = vpack.c.b16 %v365, %v364
  %v469 = vpack.c.b16 %v367, %v366
  %v470 = vpack.c.b16 %v369, %v368
  %v471 = vpack.c.b16 %v371, %v370
  %v472 = vpack.c.b16 %v373, %v372
  %v473 = vpack.c.b16 %v375, %v374
  %v474 = vpack.c.b16 %v377, %v376
  %v475 = vpack.c.b16 %v379, %v378
  %v476 = vpack.c.b16 %v381, %v380
  %v477 = vpack.c.b16 %v383, %v382
  %v478 = vpack.c.b16 %v385, %v384
  %v479 = vpack.c.b16 %v387, %v386
  %v480 = vpack.c.b16 %v389, %v388
  %v481 = vpack.c.b16 %v391, %v390
  %v482 = vpack.c.b16 %v393, %v392
  %v483 = vpack.c.b16 %v395, %v394
  %v484 = vpack.c.b16 %v397, %v396
  %v485 = vpack.c.b16 %v399, %v398
  %v486 = vpack.c.b16 %v401, %v400
  %v487 = vpack.c.b16 %v403, %v402
  %v488 = vpack.c.b16 %v405, %v404
  %v489 = vpack.c.b16 %v407, %v406
  %v490 = vpack.c.b16 %v409, %v408
  %v491 = vpack.c.b16 %v411, %v410
  %v492 = vpack.c.b16 %v413, %v412
  %v493 = vpack.c.b16 %v415, %v414
  %v494 = vpack.c.b16 %v417, %v416
  %v495 = vpack.c.b16 %v419, %v418
  %v496 = vpack.c.b16 %v421, %v420
  %v497 = vpack.c.b16 %v423, %v422
  %v498 = vpack.c.b16 %v425, %v424
  %v499 = vpack.c.b16 %v427, %v426
  %v500 = vpack.c.b16 %v429, %v428
  %v501 = vpack.c.b16 %v431, %v430
  %v502 = vpack.c.b16 %v433, %v432
  %v503 = vpack.c.b16 %v435, %v434
  %v504 = vpack.c.b16 %v437, %v436
  %v505 = vpack.c.b16 %v439, %v438
  %v506 = vpack.c.b16 %v441, %v440
  %v507 = vpack.c.b16 %v443, %v442
  %572 = vmatprep.subr.bf16.mxu0 0
  %573 = vmatpush1.bf16.msra.mxu0 %v451
  %574 = vmatprep.subr.bf16.mxu0 0
  %575 = vmatpush1.bf16.msra.mxu0 %v450
  %576 = vmatprep.subr.bf16.mxu0 0
  %577 = vmatpush1.bf16.msra.mxu0 %v449
  %578 = vmatprep.subr.bf16.mxu0 0
  %579 = vmatpush1.bf16.msra.mxu0 %v448
  %580 = vmatprep.subr.bf16.mxu0 0
  %581 = vmatpush1.bf16.msra.mxu0 %v447
  %582 = vmatprep.subr.bf16.mxu0 0
  %583 = vmatpush1.bf16.msra.mxu0 %v446
  %584 = vmatprep.subr.bf16.mxu0 0
  %585 = vmatpush1.bf16.msra.mxu0 %v445
  %586 = vmatprep.subr.bf16.mxu0 0
  %587 = vmatpush1.bf16.msra.mxu0 %v444
  %588 = vmatprep.subr.bf16.mxu0 0
  %589 = vmatpush2.bf16.msra.mxu0 %v459
  %590 = vmatprep.subr.bf16.mxu0 0
  %591 = vmatpush2.bf16.msra.mxu0 %v458
  %592 = vmatprep.subr.bf16.mxu0 0
  %593 = vmatpush2.bf16.msra.mxu0 %v457
  %594 = vmatprep.subr.bf16.mxu0 0
  %595 = vmatpush2.bf16.msra.mxu0 %v456
  %596 = vmatprep.subr.bf16.mxu0 0
  %597 = vmatpush2.bf16.msra.mxu0 %v455
  %598 = vmatprep.subr.bf16.mxu0 0
  %599 = vmatpush2.bf16.msra.mxu0 %v454
  %600 = vmatprep.subr.bf16.mxu0 0
  %601 = vmatpush2.bf16.msra.mxu0 %v453
  %602 = vmatprep.subr.bf16.mxu0 0
  %603 = vmatpush2.bf16.msra.mxu0 %v452
  %604 = vmatprep.mubr.bf16.mxu0 %v173
  %605 = vmatmul.mubr.bf16.gmra.mxu0 %v172
  %v606 = vpop.f32.mrf.mxu0
  %v607 = vadd.f32 %v158, %v606
  %v608 = vpop.f32.mrf.mxu0
  %v609 = vpop.f32.mrf.mxu0
  %v610 = vpop.f32.mrf.mxu0
  %611 = vdwg.mxu0
  %612 = vmatprep.subr.bf16.mxu0 0
  %613 = vmatpush1.bf16.msra.mxu0 %v467
  %614 = vmatprep.subr.bf16.mxu0 0
  %615 = vmatpush1.bf16.msra.mxu0 %v466
  %616 = vmatprep.subr.bf16.mxu0 0
  %617 = vmatpush1.bf16.msra.mxu0 %v465
  %618 = vmatprep.subr.bf16.mxu0 0
  %619 = vmatpush1.bf16.msra.mxu0 %v464
  %620 = vmatprep.subr.bf16.mxu0 0
  %621 = vmatpush1.bf16.msra.mxu0 %v463
  %622 = vmatprep.subr.bf16.mxu0 0
  %623 = vmatpush1.bf16.msra.mxu0 %v462
  %624 = vmatprep.subr.bf16.mxu0 0
  %625 = vmatpush1.bf16.msra.mxu0 %v461
  %626 = vmatprep.subr.bf16.mxu0 0
  %627 = vmatpush1.bf16.msra.mxu0 %v460
  %628 = vmatprep.subr.bf16.mxu0 0
  %629 = vmatpush2.bf16.msra.mxu0 %v475
  %630 = vmatprep.subr.bf16.mxu0 0
  %631 = vmatpush2.bf16.msra.mxu0 %v474
  %632 = vmatprep.subr.bf16.mxu0 0
  %633 = vmatpush2.bf16.msra.mxu0 %v473
  %634 = vmatprep.subr.bf16.mxu0 0
  %635 = vmatpush2.bf16.msra.mxu0 %v472
  %636 = vmatprep.subr.bf16.mxu0 0
  %637 = vmatpush2.bf16.msra.mxu0 %v471
  %638 = vmatprep.subr.bf16.mxu0 0
  %639 = vmatpush2.bf16.msra.mxu0 %v470
  %640 = vmatprep.subr.bf16.mxu0 0
  %641 = vmatpush2.bf16.msra.mxu0 %v469
  %642 = vmatprep.subr.bf16.mxu0 0
  %643 = vmatpush2.bf16.msra.mxu0 %v468
  %644 = vmatprep.mubr.bf16.mxu0 %v175
  %645 = vmatmul.mubr.bf16.gmra.mxu0 %v174
  %v646 = vpop.f32.mrf.mxu0
  %v647 = vadd.f32 %v607, %v646
  %v648 = vpop.f32.mrf.mxu0
  %v649 = vpop.f32.mrf.mxu0
  %v650 = vpop.f32.mrf.mxu0
  %651 = vdwg.mxu0
  %652 = vmatprep.subr.bf16.mxu0 0
  %653 = vmatpush1.bf16.msra.mxu0 %v483
  %654 = vmatprep.subr.bf16.mxu0 0
  %655 = vmatpush1.bf16.msra.mxu0 %v482
  %656 = vmatprep.subr.bf16.mxu0 0
  %657 = vmatpush1.bf16.msra.mxu0 %v481
  %658 = vmatprep.subr.bf16.mxu0 0
  %659 = vmatpush1.bf16.msra.mxu0 %v480
  %660 = vmatprep.subr.bf16.mxu0 0
  %661 = vmatpush1.bf16.msra.mxu0 %v479
  %662 = vmatprep.subr.bf16.mxu0 0
  %663 = vmatpush1.bf16.msra.mxu0 %v478
  %664 = vmatprep.subr.bf16.mxu0 0
  %665 = vmatpush1.bf16.msra.mxu0 %v477
  %666 = vmatprep.subr.bf16.mxu0 0
  %667 = vmatpush1.bf16.msra.mxu0 %v476
  %668 = vmatprep.subr.bf16.mxu0 0
  %669 = vmatpush2.bf16.msra.mxu0 %v491
  %670 = vmatprep.subr.bf16.mxu0 0
  %671 = vmatpush2.bf16.msra.mxu0 %v490
  %672 = vmatprep.subr.bf16.mxu0 0
  %673 = vmatpush2.bf16.msra.mxu0 %v489
  %674 = vmatprep.subr.bf16.mxu0 0
  %675 = vmatpush2.bf16.msra.mxu0 %v488
  %676 = vmatprep.subr.bf16.mxu0 0
  %677 = vmatpush2.bf16.msra.mxu0 %v487
  %678 = vmatprep.subr.bf16.mxu0 0
  %679 = vmatpush2.bf16.msra.mxu0 %v486
  %680 = vmatprep.subr.bf16.mxu0 0
  %681 = vmatpush2.bf16.msra.mxu0 %v485
  %682 = vmatprep.subr.bf16.mxu0 0
  %683 = vmatpush2.bf16.msra.mxu0 %v484
  %684 = vmatprep.mubr.bf16.mxu0 %v177
  %685 = vmatmul.mubr.bf16.gmra.mxu0 %v176
  %v686 = vpop.f32.mrf.mxu0
  %v687 = vadd.f32 %v647, %v686
  %v688 = vpop.f32.mrf.mxu0
  %v689 = vpop.f32.mrf.mxu0
  %v690 = vpop.f32.mrf.mxu0
  %691 = vdwg.mxu0
  %692 = vmatprep.subr.bf16.mxu0 0
  %693 = vmatpush1.bf16.msra.mxu0 %v499
  %694 = vmatprep.subr.bf16.mxu0 0
  %695 = vmatpush1.bf16.msra.mxu0 %v498
  %696 = vmatprep.subr.bf16.mxu0 0
  %697 = vmatpush1.bf16.msra.mxu0 %v497
  %698 = vmatprep.subr.bf16.mxu0 0
  %699 = vmatpush1.bf16.msra.mxu0 %v496
  %700 = vmatprep.subr.bf16.mxu0 0
  %701 = vmatpush1.bf16.msra.mxu0 %v495
  %702 = vmatprep.subr.bf16.mxu0 0
  %703 = vmatpush1.bf16.msra.mxu0 %v494
  %704 = vmatprep.subr.bf16.mxu0 0
  %705 = vmatpush1.bf16.msra.mxu0 %v493
  %706 = vmatprep.subr.bf16.mxu0 0
  %707 = vmatpush1.bf16.msra.mxu0 %v492
  %708 = vmatprep.subr.bf16.mxu0 0
  %709 = vmatpush2.bf16.msra.mxu0 %v507
  %710 = vmatprep.subr.bf16.mxu0 0
  %711 = vmatpush2.bf16.msra.mxu0 %v506
  %712 = vmatprep.subr.bf16.mxu0 0
  %713 = vmatpush2.bf16.msra.mxu0 %v505
  %714 = vmatprep.subr.bf16.mxu0 0
  %715 = vmatpush2.bf16.msra.mxu0 %v504
  %716 = vmatprep.subr.bf16.mxu0 0
  %717 = vmatpush2.bf16.msra.mxu0 %v503
  %718 = vmatprep.subr.bf16.mxu0 0
  %719 = vmatpush2.bf16.msra.mxu0 %v502
  %720 = vmatprep.subr.bf16.mxu0 0
  %721 = vmatpush2.bf16.msra.mxu0 %v501
  %722 = vmatprep.subr.bf16.mxu0 0
  %723 = vmatpush2.bf16.msra.mxu0 %v500
  %724 = vmatprep.mubr.bf16.mxu0 %v179
  %725 = vmatmul.mubr.bf16.gmra.mxu0 %v178
  %v726 = vpop.f32.mrf.mxu0
  %v727 = vadd.f32 %v687, %v726
  %v728 = vpop.f32.mrf.mxu0
  %v729 = vpop.f32.mrf.mxu0
  %v730 = vpop.f32.mrf.mxu0
  %731 = vdwg.mxu0
  %v732 = vmax.f32 %v727, 0.0
  %v733 = vld [vmem:[%s3] sm:$0xff]
  %v734 = vld [vmem:[%s3 + $0x8] sm:$0xff]
  %v735 = vld [vmem:[%s3 + $0x10] sm:$0xff]
  %v736 = vld [vmem:[%s3 + $0x18] sm:$0xff]
  %v737 = vld [vmem:[%s3 + $0x20] sm:$0xff]
  %v738 = vld [vmem:[%s3 + $0x28] sm:$0xff]
  %v739 = vld [vmem:[%s3 + $0x30] sm:$0xff]
  %v740 = vld [vmem:[%s3 + $0x38] sm:$0xff]
  %v741 = vld [vmem:[%s3 + $0x40] sm:$0xff]
  %v742 = vld [vmem:[%s3 + $0x48] sm:$0xff]
  %v743 = vld [vmem:[%s3 + $0x50] sm:$0xff]
  %v744 = vld [vmem:[%s3 + $0x58] sm:$0xff]
  %v745 = vld [vmem:[%s3 + $0x60] sm:$0xff]
  %v746 = vld [vmem:[%s3 + $0x68] sm:$0xff]
  %v747 = vld [vmem:[%s3 + $0x70] sm:$0xff]
  %v748 = vld [vmem:[%s3 + $0x78] sm:$0xff]
  %v749 = vld [vmem:[%s4] sm:$0x1]
  %v751 = vlaneseq
  %v752 = vshrl.u32 %v751, 7
  %v753 = vsub.s32 0, %v752
  %v754 = vrot.slane %v749, %v753
  %756 = vmatprep.subr.mxu0 0.0
  %757 = vmatpush1.msra.mxu0 %v748
  %758 = vmatprep.subr.mxu0 0.0
  %759 = vmatpush1.msra.mxu0 %v747
  %760 = vmatprep.subr.mxu0 0.0
  %761 = vmatpush1.msra.mxu0 %v746
  %762 = vmatprep.subr.mxu0 0.0
  %763 = vmatpush1.msra.mxu0 %v745
  %764 = vmatprep.subr.mxu0 0.0
  %765 = vmatpush1.msra.mxu0 %v744
  %766 = vmatprep.subr.mxu0 0.0
  %767 = vmatpush1.msra.mxu0 %v743
  %768 = vmatprep.subr.mxu0 0.0
  %769 = vmatpush1.msra.mxu0 %v742
  %770 = vmatprep.subr.mxu0 0.0
  %771 = vmatpush1.msra.mxu0 %v741
  %772 = vmatprep.subr.mxu0 0.0
  %773 = vmatpush1.msra.mxu0 %v740
  %774 = vmatprep.subr.mxu0 0.0
  %775 = vmatpush1.msra.mxu0 %v739
  %776 = vmatprep.subr.mxu0 0.0
  %777 = vmatpush1.msra.mxu0 %v738
  %778 = vmatprep.subr.mxu0 0.0
  %779 = vmatpush1.msra.mxu0 %v737
  %780 = vmatprep.subr.mxu0 0.0
  %781 = vmatpush1.msra.mxu0 %v736
  %782 = vmatprep.subr.mxu0 0.0
  %783 = vmatpush1.msra.mxu0 %v735
  %784 = vmatprep.subr.mxu0 0.0
  %785 = vmatpush1.msra.mxu0 %v734
  %786 = vmatprep.subr.mxu0 0.0
  %787 = vmatpush1.msra.mxu0 %v733
  %788 = vmatprep.subr.mxu0 0.0
  %789 = vmatpush2.msra.mxu0 0.0
  %790 = vmatprep.subr.mxu0 0.0
  %791 = vmatpush2.msra.mxu0 0.0
  %792 = vmatprep.subr.mxu0 0.0
  %793 = vmatpush2.msra.mxu0 0.0
  %794 = vmatprep.subr.mxu0 0.0
  %795 = vmatpush2.msra.mxu0 0.0
  %796 = vmatprep.subr.mxu0 0.0
  %797 = vmatpush2.msra.mxu0 0.0
  %798 = vmatprep.subr.mxu0 0.0
  %799 = vmatpush2.msra.mxu0 0.0
  %800 = vmatprep.subr.mxu0 0.0
  %801 = vmatpush2.msra.mxu0 0.0
  %802 = vmatprep.subr.mxu0 0.0
  %803 = vmatpush2.msra.mxu0 0.0
  %804 = vmatprep.subr.mxu0 0.0
  %805 = vmatpush2.msra.mxu0 0.0
  %806 = vmatprep.subr.mxu0 0.0
  %807 = vmatpush2.msra.mxu0 0.0
  %808 = vmatprep.subr.mxu0 0.0
  %809 = vmatpush2.msra.mxu0 0.0
  %810 = vmatprep.subr.mxu0 0.0
  %811 = vmatpush2.msra.mxu0 0.0
  %812 = vmatprep.subr.mxu0 0.0
  %813 = vmatpush2.msra.mxu0 0.0
  %814 = vmatprep.subr.mxu0 0.0
  %815 = vmatpush2.msra.mxu0 0.0
  %816 = vmatprep.subr.mxu0 0.0
  %817 = vmatpush2.msra.mxu0 0.0
  %818 = vmatprep.subr.mxu0 0.0
  %819 = vmatpush2.msra.mxu0 0.0
  %820 = vmatprep.mubr.f32.mxu0 0.0
  %821 = vmatmul.mubr.f32.gmra.mxu0 %v732
  %v822 = vpop.f32.mrf.mxu0
  %v823 = vadd.f32 %v754, %v822
  %v824 = vpop.f32.mrf.mxu0
  %825 = vdwg.mxu0
  %v826 = vlaneseq
  %v827 = vand.u32 %v826, 127
  %vm828 = vcmp.lt.s32.totalorder %v827, 16
  %v829 = vsel %vm828, %v823, -1e+30
  %830 = vmax.xlane.f32.xlu0 %v829
  %v831 = vpop.xlane.xlu0 %830
  %v832 = vsub.f32 %v829, %v831
  %v833 = vmul.f32 %v832, 1.442695
  %v834 = vpow.pop %v833
  %v835 = vsel %vm828, %v834, 0.0
  %836 = vadd.xlane.f32.xlu0 %v835
  %v837 = vpop.xlane.xlu0 %836
  %v838 = vlog2.pop %v837
  %v839 = vmul.f32 %v838, 0.6931472
  %v840 = vadd.f32 %v831, %v839
  %v841 = vsub.f32 %v823, %v840
  %842 = vst [vmem:[%s5] sm:$0xff] %v823
  %843 = vst [vmem:[%s5 + $0x8] sm:$0xff] %v841
  // Predicated region
  $region22: #{ppo_policy_forward.1} parent=0 // pred_check
    _
  $region23: #{ppo_policy_forward.1} parent=0 // pred_check_branch
    %845 = sbr.rel (0) target = $region25
  $region24: #{ppo_policy_forward.1} parent=0 // pred_region
    _
  $region25: #{ppo_policy_forward.1} parent=0 // pred_fallthru
    _
  // Predicated region
  $region26: #{ppo_policy_forward.1} parent=0 // pred_check
    _
  $region27: #{ppo_policy_forward.1} parent=0 // pred_check_branch
    %847 = sbr.rel (0) target = $region29
  $region28: #{ppo_policy_forward.1} parent=0 // pred_region
    _
  $region29: #{ppo_policy_forward.1} parent=0 // pred_fallthru
    _

</llo_original>
